<compile_context>
chip_gen: v7x
topology: tpu7x:2x2x1
jax: 0.10.0
libtpu: 0.0.40
codegen_flags: <defaults>
</compile_context>

<pallas_src>
import jax
import jax.numpy as jnp
from jax.experimental import pallas as pl
from jax.experimental.pallas import tpu as pltpu


def _round_up(x, m):
    return (x + m - 1) // m * m


def gaussian_layer_kernel(x_ref, w_ref, b_ref, eps_ref, sample_ref, unc_ref):
    d = w_ref.shape[0]  # d_model

    # Fused projection: one bf16 MXU pass, f32 accumulation -> [mean | log_var].
    proj = jnp.dot(x_ref[...], w_ref[...], preferred_element_type=jnp.float32)
    proj = proj + b_ref[...]                     # f32 bias add

    mean = proj[:, :d]                           # lane-block aligned split (D % 128 == 0)
    log_var = proj[:, d:]

    # Reparameterization in f32: exp -> EUP slot, mul/add -> VPU; both have slack
    # under the matmul, so this is effectively free filler.
    std = jnp.exp(0.5 * log_var)
    sample = mean + eps_ref[...].astype(jnp.float32) * std
    sample_ref[...] = sample.astype(sample_ref.dtype)

    # uncertainty = mean(log_var, axis=-1), produced lane-dense as a (1, tile_m)
    # row via a tiny MXU contraction (ones @ log_var^T). Avoids a (tile_m, 1)
    # masked-store column output.
    ones_rows = jnp.ones((8, d), jnp.float32)
    row_sums = jnp.einsum("rd,td->rt", ones_rows, log_var,
                          preferred_element_type=jnp.float32)
    unc_ref[...] = (row_sums[0:1, :] * (1.0 / d)).astype(unc_ref.dtype)


def gaussian_layer(x, w_cat_t, b_cat, eps, *, tile_m=256):
    """x: (B, S, D); w_cat_t: (D, 2D) = [Wm^T | Wv^T]; b_cat: (2D,); eps: (B, S, D).

    Returns (sample (B, S, D) in x.dtype, uncertainty (B, S) f32).
    """
    B, S, D = x.shape
    assert D % 128 == 0, "d_model must be a multiple of 128 (lane width) for this kernel"
    assert tile_m % 128 == 0, "tile_m must be a multiple of 128"
    N = B * S

    compute_dtype = jnp.bfloat16
    x2 = x.reshape(N, D).astype(compute_dtype)
    eps2 = eps.reshape(N, D).astype(compute_dtype)
    w = w_cat_t.astype(compute_dtype)                       # (D, 2D) bf16, MXU-native
    b2 = b_cat.reshape(1, 2 * D).astype(jnp.float32)        # keep bias add in f32

    # Row tiling: cap the tile at the (8-rounded) row count so tiny inputs are not
    # padded all the way to tile_m; otherwise pad N up to a multiple of tile_m.
    tile = min(tile_m, _round_up(N, 8))
    n_pad = _round_up(N, tile)
    if n_pad != N:
        pad = n_pad - N
        x2 = jnp.pad(x2, ((0, pad), (0, 0)))
        eps2 = jnp.pad(eps2, ((0, pad), (0, 0)))
    grid_m = n_pad // tile   # NOTE: on v7x prefer grid_m >= 2 and even (2 TCs/chip)

    # Weights / bias are grid-invariant (index_map == (0, 0)) -> single-buffer them.
    invariant = pl.Buffered(buffer_count=1)

    sample, unc = pl.pallas_call(
        gaussian_layer_kernel,
        out_shape=(
            jax.ShapeDtypeStruct((n_pad, D), x.dtype),       # sample
            jax.ShapeDtypeStruct((1, n_pad), jnp.float32),   # uncertainty (lane-dense)
        ),
        grid_spec=pltpu.PrefetchScalarGridSpec(
            num_scalar_prefetch=0,
            grid=(grid_m,),
            in_specs=[
                pl.BlockSpec((tile, D), lambda i: (i, 0)),                            # x tile
                pl.BlockSpec((D, 2 * D), lambda i: (0, 0), pipeline_mode=invariant),  # W_cat^T
                pl.BlockSpec((1, 2 * D), lambda i: (0, 0), pipeline_mode=invariant),  # b_cat
                pl.BlockSpec((tile, D), lambda i: (i, 0)),                            # eps tile
            ],
            out_specs=[
                pl.BlockSpec((tile, D), lambda i: (i, 0)),   # sample tile
                pl.BlockSpec((1, tile), lambda i: (0, i)),   # uncertainty row segment
            ],
        ),
        compiler_params=pltpu.CompilerParams(
            dimension_semantics=("parallel",),
            vmem_limit_bytes=32 * 1024 * 1024,
        ),
    )(x2, w, b2, eps2)

    sample = sample[:N].reshape(B, S, D)
    uncertainty = unc[0, :N].reshape(B, S)
    return sample, uncertainty


def init_params(key, d_model):
    """Deterministic nn.Linear-style init U(-1/sqrt(d), 1/sqrt(d)); fused layout."""
    k1, k2, k3, k4 = jax.random.split(key, 4)
    bound = float(d_model) ** -0.5
    # Stored directly as W^T (in, out) so the kernel computes x @ W^T.
    wm_t = jax.random.uniform(k1, (d_model, d_model), jnp.float32, -bound, bound)
    bm = jax.random.uniform(k2, (d_model,), jnp.float32, -bound, bound)
    wv_t = jax.random.uniform(k3, (d_model, d_model), jnp.float32, -bound, bound)
    bv = jax.random.uniform(k4, (d_model,), jnp.float32, -bound, bound)
    w_cat_t = jnp.concatenate([wm_t, wv_t], axis=1)   # (D, 2D) = [Wm^T | Wv^T]
    b_cat = jnp.concatenate([bm, bv], axis=0)         # (2D,)
    return w_cat_t, b_cat


def reference(x, w_cat_t, b_cat, eps):
    """Pure-JAX reference mirroring the kernel's math (bf16 matmul, f32 accumulate)."""
    B, S, D = x.shape
    xf = x.reshape(-1, D).astype(jnp.bfloat16)
    proj = jnp.dot(xf, w_cat_t.astype(jnp.bfloat16),
                   preferred_element_type=jnp.float32) + b_cat.astype(jnp.float32)
    mean, log_var = proj[:, :D], proj[:, D:]
    std = jnp.exp(0.5 * log_var)
    sample = mean + eps.reshape(-1, D).astype(jnp.float32) * std
    uncertainty = jnp.mean(log_var, axis=-1)
    return sample.reshape(B, S, D), uncertainty.reshape(B, S)


if __name__ == "__main__":
    d_model = 128   # small, lane-aligned stand-in for the module's d_model=512
    B, S = 2, 8

    key = jax.random.PRNGKey(0)
    kx, kp, ke = jax.random.split(key, 3)

    # Activations generated directly in bf16 (the kernel compute dtype) so the
    # wrapper does not pay an extra HBM round-trip astype before the kernel.
    x = jax.random.normal(kx, (B, S, d_model), jnp.float32).astype(jnp.bfloat16)
    w_cat_t, b_cat = init_params(kp, d_model)
    # eps ~ randn_like(std): PyTorch's RNG stream cannot be matched, so eps is
    # generated deterministically here and fed to the kernel (could instead be
    # drawn in-kernel with pltpu.prng_seed / pltpu.stateful_normal to drop its
    # HBM traffic entirely).
    eps = jax.random.normal(ke, (B, S, d_model), jnp.float32).astype(jnp.bfloat16)

    sample, uncertainty = gaussian_layer(x, w_cat_t, b_cat, eps)
    jax.block_until_ready((sample, uncertainty))

    # Correctness check against the pure-JAX reference.
    ref_sample, ref_unc = reference(x, w_cat_t, b_cat, eps)
    assert sample.shape == (B, S, d_model)
    assert uncertainty.shape == (B, S)
    assert jnp.allclose(sample.astype(jnp.float32), ref_sample.astype(jnp.float32),
                        atol=5e-2, rtol=5e-2)           # sample is bf16 at the output
    assert jnp.allclose(uncertainty, ref_unc, atol=2e-3, rtol=2e-3)

    print("KERNEL_OK")
</pallas_src>

<mosaic_0001>
module attributes {stable_mosaic.version = 11 : i64} {
  func.func @gaussian_layer_kernel(%arg0: i32, %arg1: memref<16x128xbf16, #tpu.memory_space<vmem>>, %arg2: memref<128x256xbf16, #tpu.memory_space<vmem>>, %arg3: memref<1x256xf32, #tpu.memory_space<vmem>>, %arg4: memref<16x128xbf16, #tpu.memory_space<vmem>>, %arg5: memref<16x128xbf16, #tpu.memory_space<vmem>>, %arg6: memref<1x16xf32, #tpu.memory_space<vmem>>) attributes {dimension_semantics = [#tpu.dimension_semantics<parallel>], iteration_bounds = array<i64: 1>, scalar_prefetch = 0 : i64, scratch_operands = 0 : i64, tpu.core_type = #tpu.core_type<tc>, window_params = [{transform_indices = @transform_0, window_bounds = array<i64: 16, 128>}, {pipeline_mode = #tpu.pipeline_mode<synchronous>, transform_indices = @transform_1, window_bounds = array<i64: 128, 256>}, {pipeline_mode = #tpu.pipeline_mode<synchronous>, transform_indices = @transform_2, window_bounds = array<i64: 1, 256>}, {transform_indices = @transform_3, window_bounds = array<i64: 16, 128>}, {transform_indices = @transform_4, window_bounds = array<i64: 16, 128>}, {transform_indices = @transform_5, window_bounds = array<i64: 1, 16>}]} {
    %c0 = arith.constant 0 : index
    %c0_0 = arith.constant 0 : index
    %0 = vector.load %arg1[%c0, %c0_0] : memref<16x128xbf16, #tpu.memory_space<vmem>>, vector<16x128xbf16>
    %c0_1 = arith.constant 0 : index
    %c0_2 = arith.constant 0 : index
    %1 = vector.load %arg2[%c0_1, %c0_2] : memref<128x256xbf16, #tpu.memory_space<vmem>>, vector<128x256xbf16>
    %cst = arith.constant dense<0.000000e+00> : vector<16x256xf32>
    %2 = tpu.matmul %0, %1, %cst {dimension_numbers = #tpu.dot_dimension_numbers<[1], [0], [0], [1], [0, 0, 1, 1], [], []>} : vector<16x128xbf16>, vector<128x256xbf16>, vector<16x256xf32> -> vector<16x256xf32>
    %c0_3 = arith.constant 0 : index
    %c0_4 = arith.constant 0 : index
    %3 = vector.load %arg3[%c0_3, %c0_4] : memref<1x256xf32, #tpu.memory_space<vmem>>, vector<1x256xf32>
    %4 = vector.broadcast %3 : vector<1x256xf32> to vector<16x256xf32>
    %5 = arith.addf %2, %4 : vector<16x256xf32>
    %6 = vector.extract_strided_slice %5 {offsets = [0, 0], sizes = [16, 128], strides = [1, 1]} : vector<16x256xf32> to vector<16x128xf32>
    %7 = vector.extract_strided_slice %5 {offsets = [0, 128], sizes = [16, 128], strides = [1, 1]} : vector<16x256xf32> to vector<16x128xf32>
    %cst_5 = arith.constant 5.000000e-01 : f32
    %8 = vector.broadcast %cst_5 : f32 to vector<16x128xf32>
    %9 = arith.mulf %8, %7 : vector<16x128xf32>
    %10 = math.exp %9 : vector<16x128xf32>
    %c0_6 = arith.constant 0 : index
    %c0_7 = arith.constant 0 : index
    %11 = vector.load %arg4[%c0_6, %c0_7] : memref<16x128xbf16, #tpu.memory_space<vmem>>, vector<16x128xbf16>
    %12 = arith.extf %11 : vector<16x128xbf16> to vector<16x128xf32>
    %13 = arith.mulf %12, %10 : vector<16x128xf32>
    %14 = arith.addf %6, %13 : vector<16x128xf32>
    %15 = arith.truncf %14 : vector<16x128xf32> to vector<16x128xbf16>
    %c0_8 = arith.constant 0 : index
    %c0_9 = arith.constant 0 : index
    %16 = vector.load %arg5[%c0_8, %c0_9] : memref<16x128xbf16, #tpu.memory_space<vmem>>, vector<16x128xbf16>
    tpu.vector_store %arg5[%c0_8, %c0_9], %15 {strides = array<i32>} : memref<16x128xbf16, #tpu.memory_space<vmem>>, vector<16x128xbf16>,
    %cst_10 = arith.constant 1.000000e+00 : f32
    %17 = vector.broadcast %cst_10 : f32 to vector<8x128xf32>
    "tpu.trace_start"() <{level = 10 : i32, message = "rd,td->rt"}> : () -> ()
    %cst_11 = arith.constant dense<0.000000e+00> : vector<8x16xf32>
    %18 = tpu.matmul %17, %7, %cst_11 {dimension_numbers = #tpu.dot_dimension_numbers<[1], [1], [0], [0], [0, 0, 1, 0], [], []>} : vector<8x128xf32>, vector<16x128xf32>, vector<8x16xf32> -> vector<8x16xf32>
    "tpu.trace_stop"() : () -> ()
    %19 = vector.extract_strided_slice %18 {offsets = [0, 0], sizes = [1, 16], strides = [1, 1]} : vector<8x16xf32> to vector<1x16xf32>
    %cst_12 = arith.constant 7.812500e-03 : f32
    %20 = vector.broadcast %cst_12 : f32 to vector<1x16xf32>
    %21 = arith.mulf %19, %20 : vector<1x16xf32>
    %c0_13 = arith.constant 0 : index
    %c0_14 = arith.constant 0 : index
    %22 = vector.load %arg6[%c0_13, %c0_14] : memref<1x16xf32, #tpu.memory_space<vmem>>, vector<1x16xf32>
    tpu.vector_store %arg6[%c0_13, %c0_14], %21 {strides = array<i32>} : memref<1x16xf32, #tpu.memory_space<vmem>>, vector<1x16xf32>,
    return
  }
  func.func @transform_0(%arg0: i32) -> (i32, i32) {
    %c0_i32 = arith.constant 0 : i32
    %c0_i32_0 = arith.constant 0 : i32
    return %arg0, %c0_i32 : i32, i32
  }
  func.func @transform_1(%arg0: i32) -> (i32, i32) {
    %c0_i32 = arith.constant 0 : i32
    %c0_i32_0 = arith.constant 0 : i32
    %c0_i32_1 = arith.constant 0 : i32
    return %c0_i32, %c0_i32_0 : i32, i32
  }
  func.func @transform_2(%arg0: i32) -> (i32, i32) {
    %c0_i32 = arith.constant 0 : i32
    %c0_i32_0 = arith.constant 0 : i32
    %c0_i32_1 = arith.constant 0 : i32
    return %c0_i32, %c0_i32_0 : i32, i32
  }
  func.func @transform_3(%arg0: i32) -> (i32, i32) {
    %c0_i32 = arith.constant 0 : i32
    %c0_i32_0 = arith.constant 0 : i32
    return %arg0, %c0_i32 : i32, i32
  }
  func.func @transform_4(%arg0: i32) -> (i32, i32) {
    %c0_i32 = arith.constant 0 : i32
    %c0_i32_0 = arith.constant 0 : i32
    return %arg0, %c0_i32 : i32, i32
  }
  func.func @transform_5(%arg0: i32) -> (i32, i32) {
    %c0_i32 = arith.constant 0 : i32
    %c0_i32_0 = arith.constant 0 : i32
    return %c0_i32, %arg0 : i32, i32
  }
}

</mosaic_0001>

<llo_original>
// kernel: tpu_custom_call.1
$region0: #{tpu_custom_call.1}
  #allocation0 [shape = 'u32[]', space=smem, size = 0x4, offset = 0x4, fixed_abs, tag = 'smem constant byte address 0x4 - core index']
  #allocation1 [shape = 'u32[144,128]{1,0:T(1,128)}', space=vmem, size = 0x12000, scoped, tag = 'internal scratch']
  %s0 = inlined_call_operand.hbm [shape: bf16[16,128], index: 0, kind: input, shape index: {}]
  %s1 = inlined_call_operand.hbm [shape: bf16[128,256], index: 1, kind: input, shape index: {}]
  %s2 = inlined_call_operand.vmem [shape: f32[1,256], index: 2, kind: input, shape index: {}]
  %s3 = inlined_call_operand.vmem [shape: bf16[16,128], index: 3, kind: input, shape index: {}]
  %s4 = inlined_call_operand.hbm [shape: bf16[16,128], index: 4, kind: output, shape index: {0}]
  %s5 = inlined_call_operand.hbm [shape: f32[1,16], index: 5, kind: output, shape index: {1}]
  %6 = xla_tuple %s4, %s5
  %s7 = sld [smem:[#allocation0]]
  $region42: #{tpu_custom_call.1} parent=0
    _
  %s9 = ssub.s32 1, %s7
  %s10 = scalar_select 0, %s9, %s7
  $region1: #{tpu_custom_call.1} parent=0
    #allocation2 [shape = 'u8[4096]{0}', space=vmem, size = 0x1000, scoped, tag = 'input window, operand 0, single buffered']
    #allocation3 [shape = 's32[1]{0}', space=sflag, size = 0x4, scoped, tag = 'scoped memory for tpu_custom_call.1']
    #allocation4 [shape = 's32[1]{0}', space=sflag, size = 0x4, scoped, tag = 'scoped memory for tpu_custom_call.1']
    #allocation5 [shape = 'u8[65536]{0}', space=vmem, size = 0x10000, scoped, tag = 'input window, operand 1, single buffered']
    #allocation6 [shape = 's32[1]{0}', space=sflag, size = 0x4, scoped, tag = 'scoped memory for tpu_custom_call.1']
    #allocation7 [shape = 'u8[4096]{0}', space=vmem, size = 0x1000, scoped, tag = 'output window, operand 0, single buffered']
    #allocation8 [shape = 'u8[512]{0}', space=vmem, size = 0x400, scoped, tag = 'output window, operand 1, single buffered']
    #allocation9 [shape = 's32[1]{0}', space=sflag, size = 0x4, scoped, tag = 'scoped memory for tpu_custom_call.1']
    %11 = vsyncpa [#allocation3], 0
    %12 = vsyncpa [#allocation6], 0
    %13 = vsyncpa [#allocation4], 0
    %14 = vsyncpa [#allocation9], 0
    // Predicated region
    $region2: #{tpu_custom_call.1} parent=1 // pred_check
      _
    $region3: #{tpu_custom_call.1} parent=1 // pred_check_branch
      %16 = sbr.rel (0) target = $region5
    $region4: #{tpu_custom_call.1} parent=1 // pred_region
      %s18 = ssub.s32 128, 128
      %19 = vsyncadd [#allocation3], %s18
      %s20 = sshll.u32 [#allocation2], 4
      %s21 = int_to_ptr.vmem [resolvable:$true] %s20
      %26 = dma.hbm_to_vmem [thread:$0]  %s0, 128, %s21, [#allocation3], 64, 64, 4
    $region5: #{tpu_custom_call.1} parent=1 // pred_fallthru
      _
    // Predicated region
    $region6: #{tpu_custom_call.1} parent=1 // pred_check
      _
    $region7: #{tpu_custom_call.1} parent=1 // pred_check_branch
      %28 = sbr.rel (0) target = $region9
    $region8: #{tpu_custom_call.1} parent=1 // pred_region
      %s30 = ssub.s32 2048, 2048
      %31 = vsyncadd [#allocation6], %s30
      %s32 = sshll.u32 [#allocation5], 4
      %s33 = int_to_ptr.vmem [resolvable:$true] %s32
      %38 = dma.hbm_to_vmem [thread:$0]  %s1, 2048, %s33, [#allocation6], 128, 128, 8
    $region9: #{tpu_custom_call.1} parent=1 // pred_fallthru
      _
    // Predicated region
    $region10: #{tpu_custom_call.1} parent=1 // pred_check
      _
    $region11: #{tpu_custom_call.1} parent=1 // pred_check_branch
      %40 = sbr.rel (0) target = $region13
    $region12: #{tpu_custom_call.1} parent=1 // pred_region
      _
    $region13: #{tpu_custom_call.1} parent=1 // pred_fallthru
      _
    // Predicated region
    $region14: #{tpu_custom_call.1} parent=1 // pred_check
      _
    $region15: #{tpu_custom_call.1} parent=1 // pred_check_branch
      %42 = sbr.rel (0) target = $region17
    $region16: #{tpu_custom_call.1} parent=1 // pred_region
      _
    $region17: #{tpu_custom_call.1} parent=1 // pred_fallthru
      _
    // Predicated region
    $region18: #{tpu_custom_call.1} parent=1 // pred_check
      _
    $region19: #{tpu_custom_call.1} parent=1 // pred_check_branch
      %44 = sbr.rel (0) target = $region21
    $region20: #{tpu_custom_call.1} parent=1 // pred_region
      %45 = dma.done [#allocation3], 128
    $region21: #{tpu_custom_call.1} parent=1 // pred_fallthru
      _
    // Predicated region
    $region22: #{tpu_custom_call.1} parent=1 // pred_check
      _
    $region23: #{tpu_custom_call.1} parent=1 // pred_check_branch
      %47 = sbr.rel (0) target = $region25
    $region24: #{tpu_custom_call.1} parent=1 // pred_region
      %48 = dma.done [#allocation6], 2048
    $region25: #{tpu_custom_call.1} parent=1 // pred_fallthru
      _
    %v50 = vld [vmem:[#allocation2] sm:$0xf]
    %v51 = vld [vmem:[#allocation2 + $0x4] sm:$0xf]
    %v52 = vld [vmem:[#allocation5] sm:$0xff]
    %v53 = vld [vmem:[#allocation5 + $0x8] sm:$0xff]
    %v54 = vld [vmem:[#allocation5 + $0x10] sm:$0xff]
    %v55 = vld [vmem:[#allocation5 + $0x18] sm:$0xff]
    %v56 = vld [vmem:[#allocation5 + $0x20] sm:$0xff]
    %v57 = vld [vmem:[#allocation5 + $0x28] sm:$0xff]
    %v58 = vld [vmem:[#allocation5 + $0x30] sm:$0xff]
    %v59 = vld [vmem:[#allocation5 + $0x38] sm:$0xff]
    %v60 = vld [vmem:[#allocation5 + $0x40] sm:$0xff]
    %v61 = vld [vmem:[#allocation5 + $0x48] sm:$0xff]
    %v62 = vld [vmem:[#allocation5 + $0x50] sm:$0xff]
    %v63 = vld [vmem:[#allocation5 + $0x58] sm:$0xff]
    %v64 = vld [vmem:[#allocation5 + $0x60] sm:$0xff]
    %v65 = vld [vmem:[#allocation5 + $0x68] sm:$0xff]
    %v66 = vld [vmem:[#allocation5 + $0x70] sm:$0xff]
    %v67 = vld [vmem:[#allocation5 + $0x78] sm:$0xff]
    %v68 = vld [vmem:[%s2] sm:$0x3]
    %v70 = vlaneseq
    %v71 = vshrl.u32 %v70, 7
    %v72 = vsub.s32 0, %v71
    %v73 = vrot.slane %v68, %v72
    %v74 = vlaneseq
    %v75 = vshrl.u32 %v74, 7
    %v76 = vsub.s32 1, %v75
    %v77 = vrot.slane %v68, %v76
    %v82 = vunpack.c.l.b16 %v50
    %v83 = vunpack.c.l.b16 %v51
    %v84 = vpack.c.b16 %v83, %v82
    %v102 = vunpack.c.l.b16 %v52
    %v103 = vunpack.c.h.b16 %v52
    %v104 = vunpack.c.l.b16 %v53
    %v105 = vunpack.c.h.b16 %v53
    %v106 = vunpack.c.l.b16 %v54
    %v107 = vunpack.c.h.b16 %v54
    %v108 = vunpack.c.l.b16 %v55
    %v109 = vunpack.c.h.b16 %v55
    %v110 = vunpack.c.l.b16 %v56
    %v111 = vunpack.c.h.b16 %v56
    %v112 = vunpack.c.l.b16 %v57
    %v113 = vunpack.c.h.b16 %v57
    %v114 = vunpack.c.l.b16 %v58
    %v115 = vunpack.c.h.b16 %v58
    %v116 = vunpack.c.l.b16 %v59
    %v117 = vunpack.c.h.b16 %v59
    %v118 = vunpack.c.l.b16 %v60
    %v119 = vunpack.c.h.b16 %v60
    %v120 = vunpack.c.l.b16 %v61
    %v121 = vunpack.c.h.b16 %v61
    %v122 = vunpack.c.l.b16 %v62
    %v123 = vunpack.c.h.b16 %v62
    %v124 = vunpack.c.l.b16 %v63
    %v125 = vunpack.c.h.b16 %v63
    %v126 = vunpack.c.l.b16 %v64
    %v127 = vunpack.c.h.b16 %v64
    %v128 = vunpack.c.l.b16 %v65
    %v129 = vunpack.c.h.b16 %v65
    %v130 = vunpack.c.l.b16 %v66
    %v131 = vunpack.c.h.b16 %v66
    %v132 = vunpack.c.l.b16 %v67
    %v133 = vunpack.c.h.b16 %v67
    %v134 = vpack.c.b16 %v104, %v102
    %v135 = vpack.c.b16 %v105, %v103
    %v136 = vpack.c.b16 %v108, %v106
    %v137 = vpack.c.b16 %v109, %v107
    %v138 = vpack.c.b16 %v112, %v110
    %v139 = vpack.c.b16 %v113, %v111
    %v140 = vpack.c.b16 %v116, %v114
    %v141 = vpack.c.b16 %v117, %v115
    %v142 = vpack.c.b16 %v120, %v118
    %v143 = vpack.c.b16 %v121, %v119
    %v144 = vpack.c.b16 %v124, %v122
    %v145 = vpack.c.b16 %v125, %v123
    %v146 = vpack.c.b16 %v128, %v126
    %v147 = vpack.c.b16 %v129, %v127
    %v148 = vpack.c.b16 %v132, %v130
    %v149 = vpack.c.b16 %v133, %v131
    %166 = vmatprep.subr.bf16.mxu0 %v135
    %167 = vmatpush1.bf16.msra.mxu0 %v134
    %168 = vmatprep.subr.bf16.mxu0 %v137
    %169 = vmatpush1.bf16.msra.mxu0 %v136
    %170 = vmatprep.subr.bf16.mxu0 %v139
    %171 = vmatpush1.bf16.msra.mxu0 %v138
    %172 = vmatprep.subr.bf16.mxu0 %v141
    %173 = vmatpush1.bf16.msra.mxu0 %v140
    %174 = vmatprep.subr.bf16.mxu0 %v143
    %175 = vmatpush1.bf16.msra.mxu0 %v142
    %176 = vmatprep.subr.bf16.mxu0 %v145
    %177 = vmatpush1.bf16.msra.mxu0 %v144
    %178 = vmatprep.subr.bf16.mxu0 %v147
    %179 = vmatpush1.bf16.msra.mxu0 %v146
    %180 = vmatprep.subr.bf16.mxu0 %v149
    %181 = vmatpush1.bf16.msra.mxu0 %v148
    %182 = vmatprep.subr.bf16.mxu0 0
    %183 = vmatpush1.bf16.msra.mxu0 0
    %184 = vmatprep.subr.bf16.mxu0 0
    %185 = vmatpush1.bf16.msra.mxu0 0
    %186 = vmatprep.subr.bf16.mxu0 0
    %187 = vmatpush1.bf16.msra.mxu0 0
    %188 = vmatprep.subr.bf16.mxu0 0
    %189 = vmatpush1.bf16.msra.mxu0 0
    %190 = vmatprep.subr.bf16.mxu0 0
    %191 = vmatpush1.bf16.msra.mxu0 0
    %192 = vmatprep.subr.bf16.mxu0 0
    %193 = vmatpush1.bf16.msra.mxu0 0
    %194 = vmatprep.subr.bf16.mxu0 0
    %195 = vmatpush1.bf16.msra.mxu0 0
    %196 = vmatprep.subr.bf16.mxu0 0
    %197 = vmatpush1.bf16.msra.mxu0 0
    %198 = vmatprep.mubr.bf16.mxu0 0
    %199 = vmatmul.mubr.bf16.gmra.mrb[0].mxu0 %v84
    %v200 = vpop.f32.mrb[0].mxu0
    %v201 = vadd.f32 %v73, %v200
    %v202 = vpop.f32.mrb[0].mxu0
    %v203 = vadd.f32 %v77, %v202
    %v204 = vpop.f32.mrb[0].mxu0
    %v205 = vadd.f32 %v73, %v204
    %v206 = vpop.f32.mrb[0].mxu0
    %v207 = vadd.f32 %v77, %v206
    %208 = vdwg.mxu0
    %v209 = vmul.f32 %v203, 0.5
    %v210 = vmul.f32 %v207, 0.5
    %v211 = vmul.f32 %v209, 1.442695
    %v212 = vpow.pop %v211
    %v213 = vmul.f32 %v210, 1.442695
    %v214 = vpow.pop %v213
    %v215 = vld [vmem:[%s3] sm:$0xf]
    %v216 = vld [vmem:[%s3 + $0x4] sm:$0xf]
    %v217 = vunpack.c.l.bf16 %v215
    %v218 = vunpack.c.l.bf16 %v216
    %v219 = vmul.f32 %v217, %v212
    %v220 = vmul.f32 %v218, %v214
    %v221 = vadd.f32 %v201, %v219
    %v222 = vadd.f32 %v205, %v220
    %v223 = vpack.c.bf16 %v222, %v221
    %v225 = vunpack.c.l.b16 %v223
    %v226 = vunpack.c.h.b16 %v223
    %v227 = vpack.c.b16 %v225, %v225
    %v228 = vpack.c.b16 %v226, %v226
    %231 = vst [vmem:[#allocation7] sm:$0xf] %v227
    %232 = vst [vmem:[#allocation7 + $0x4] sm:$0xf] %v228
    %233 = vmatprep.subr.mxu0 0.0
    %234 = vmatpush1.xpose.msra.mxu0 %v203
    %235 = vmatprep.subr.mxu0 0.0
    %236 = vmatpush1.xpose.msra.mxu0 %v207
    %237 = vmatprep.subr.mxu0 0.0
    %238 = vmatpush1.xpose.msra.mxu0 0.0
    %239 = vmatprep.subr.mxu0 0.0
    %240 = vmatpush1.xpose.msra.mxu0 0.0
    %241 = vmatprep.subr.mxu0 0.0
    %242 = vmatpush1.xpose.msra.mxu0 0.0
    %243 = vmatprep.subr.mxu0 0.0
    %244 = vmatpush1.xpose.msra.mxu0 0.0
    %245 = vmatprep.subr.mxu0 0.0
    %246 = vmatpush1.xpose.msra.mxu0 0.0
    %247 = vmatprep.subr.mxu0 0.0
    %248 = vmatpush1.xpose.msra.mxu0 0.0
    %249 = vmatprep.subr.mxu0 0.0
    %250 = vmatpush1.xpose.msra.mxu0 0.0
    %251 = vmatprep.subr.mxu0 0.0
    %252 = vmatpush1.xpose.msra.mxu0 0.0
    %253 = vmatprep.subr.mxu0 0.0
    %254 = vmatpush1.xpose.msra.mxu0 0.0
    %255 = vmatprep.subr.mxu0 0.0
    %256 = vmatpush1.xpose.msra.mxu0 0.0
    %257 = vmatprep.subr.mxu0 0.0
    %258 = vmatpush1.xpose.msra.mxu0 0.0
    %259 = vmatprep.subr.mxu0 0.0
    %260 = vmatpush1.xpose.msra.mxu0 0.0
    %261 = vmatprep.subr.mxu0 0.0
    %262 = vmatpush1.xpose.msra.mxu0 0.0
    %263 = vmatprep.subr.mxu0 0.0
    %264 = vmatpush1.xpose.msra.mxu0 0.0
    %265 = vmatprep.subr.mxu0 0.0
    %266 = vmatpush1.xpose.msra.mxu0 0.0
    %267 = vmatprep.subr.mxu0 0.0
    %268 = vmatpush1.xpose.msra.mxu0 0.0
    %269 = vmatprep.subr.mxu0 0.0
    %270 = vmatpush1.xpose.msra.mxu0 0.0
    %271 = vmatprep.subr.mxu0 0.0
    %272 = vmatpush1.xpose.msra.mxu0 0.0
    %273 = vmatprep.subr.mxu0 0.0
    %274 = vmatpush1.xpose.msra.mxu0 0.0
    %275 = vmatprep.subr.mxu0 0.0
    %276 = vmatpush1.xpose.msra.mxu0 0.0
    %277 = vmatprep.subr.mxu0 0.0
    %278 = vmatpush1.xpose.msra.mxu0 0.0
    %279 = vmatprep.subr.mxu0 0.0
    %280 = vmatpush1.xpose.msra.mxu0 0.0
    %281 = vmatprep.subr.mxu0 0.0
    %282 = vmatpush1.xpose.msra.mxu0 0.0
    %283 = vmatprep.subr.mxu0 0.0
    %284 = vmatpush1.xpose.msra.mxu0 0.0
    %285 = vmatprep.subr.mxu0 0.0
    %286 = vmatpush1.xpose.msra.mxu0 0.0
    %287 = vmatprep.subr.mxu0 0.0
    %288 = vmatpush1.xpose.msra.mxu0 0.0
    %289 = vmatprep.subr.mxu0 0.0
    %290 = vmatpush1.xpose.msra.mxu0 0.0
    %291 = vmatprep.subr.mxu0 0.0
    %292 = vmatpush1.xpose.msra.mxu0 0.0
    %293 = vmatprep.subr.mxu0 0.0
    %294 = vmatpush1.xpose.msra.mxu0 0.0
    %295 = vmatprep.subr.mxu0 0.0
    %296 = vmatpush1.xpose.msra.mxu0 0.0
    %297 = vmatprep.mubr.f32.mxu0 0.0
    %298 = vmatmul.mubr.f32.gmra.mrb[0].mxu0 1.0
    %v299 = vpop.f32.mrb[0].mxu0
    %v300 = vadd.f32 0.0, %v299
    %v301 = vpop.f32.mrb[0].mxu0
    %302 = vdwg.mxu0
    %v303 = vmul.f32 %v300, 0.0078125
    %vm304 = vcmask 122880
    %305 = vst.msk [vmem:[#allocation8] sm:$0x1] %vm304, %v303
    // Predicated region
    $region26: #{tpu_custom_call.1} parent=1 // pred_check
      _
    $region27: #{tpu_custom_call.1} parent=1 // pred_check_branch
      %307 = sbr.rel (0) target = $region29
    $region28: #{tpu_custom_call.1} parent=1 // pred_region
      %s309 = ssub.s32 128, 128
      %310 = vsyncadd [#allocation4], %s309
      %s311 = sshll.u32 [#allocation7], 4
      %s312 = int_to_ptr.vmem [resolvable:$true] %s311
      %317 = dma.vmem_to_hbm [thread:$0]  %s312, 128, %s4, [#allocation4], 64, 64, 4
    $region29: #{tpu_custom_call.1} parent=1 // pred_fallthru
      _
    // Predicated region
    $region30: #{tpu_custom_call.1} parent=1 // pred_check
      _
    $region31: #{tpu_custom_call.1} parent=1 // pred_check_branch
      %319 = sbr.rel (0) target = $region33
    $region32: #{tpu_custom_call.1} parent=1 // pred_region
      %s321 = ssub.s32 16, 16
      %322 = vsyncadd [#allocation9], %s321
      %s324 = sshll.u32 [#allocation8], 4
      %s325 = int_to_ptr.vmem [resolvable:$true] %s324
      %327 = dma.vmem_to_hbm [thread:$0]  %s325, 16, %s5, [#allocation9]
    $region33: #{tpu_custom_call.1} parent=1 // pred_fallthru
      _
    // Predicated region
    $region34: #{tpu_custom_call.1} parent=1 // pred_check
      _
    $region35: #{tpu_custom_call.1} parent=1 // pred_check_branch
      %329 = sbr.rel (0) target = $region37
    $region36: #{tpu_custom_call.1} parent=1 // pred_region
      %330 = dma.done [#allocation4], 128
    $region37: #{tpu_custom_call.1} parent=1 // pred_fallthru
      _
    // Predicated region
    $region38: #{tpu_custom_call.1} parent=1 // pred_check
      _
    $region39: #{tpu_custom_call.1} parent=1 // pred_check_branch
      %332 = sbr.rel (0) target = $region41
    $region40: #{tpu_custom_call.1} parent=1 // pred_region
      %333 = dma.done [#allocation9], 16
    $region41: #{tpu_custom_call.1} parent=1 // pred_fallthru
      _
    %334 = vsyncpa [#allocation3], 1
    %335 = vsyncpa [#allocation6], 1
    %336 = vsyncpa [#allocation4], 1
    %337 = vsyncpa [#allocation9], 1

</llo_original>
